<compile_context>
chip_gen: v7x
topology: tpu7x:2x2x1
jax: 0.10.0
libtpu: 0.0.40
codegen_flags: <defaults>
</compile_context>

<pallas_src>
import math
import numpy as np
import jax
import jax.numpy as jnp
from jax import lax
from jax.experimental import pallas as pl
from jax.experimental.pallas import tpu as pltpu

NUM_CLASSES = 80
EPS = 1e-12

# Folded one-hot-vs-one-hot BCEWithLogits (mean over 80 classes):
#   same class : (log1p(e^-1) + 79*log 2) / 80
#   diff class : same + 1/80
_LOG2 = math.log(2.0)
_LOG1PE = math.log1p(math.exp(-1.0))
C_CLS_SAME = (_LOG1PE + (NUM_CLASSES - 1) * _LOG2) / NUM_CLASSES
C_CLS_DIFF = C_CLS_SAME + 1.0 / NUM_CLASSES


def detection_loss_kernel(pred_ref, gt_ref, out_ref):
    # pred_ref [Ft, 8, Pt] rows: x1,y1,x2,y2, score, class(f32), valid, pad
    # gt_ref   [Ft, 8, Gp] rows: x1,y1,x2,y2, class(f32), valid, pad, pad
    # out_ref  [1, 1, 8, 128] rows 0..3: cls/box/obj/count lane-partial sums
    Pt = pred_ref.shape[2]

    px1 = pred_ref[:, 0, :]; py1 = pred_ref[:, 1, :]        # [Ft, Pt]
    px2 = pred_ref[:, 2, :]; py2 = pred_ref[:, 3, :]
    ps = pred_ref[:, 4, :]                                  # objectness logits
    pc = pred_ref[:, 5, :]                                  # pred class id (exact f32)
    pv = pred_ref[:, 6, :]                                  # pred validity

    gx1 = gt_ref[:, 0, :]; gy1 = gt_ref[:, 1, :]            # [Ft, Gp]
    gx2 = gt_ref[:, 2, :]; gy2 = gt_ref[:, 3, :]
    gcl = gt_ref[:, 4, :]                                   # gt class id (exact f32)
    gv = gt_ref[:, 5, :]                                    # gt validity

    Gp = gx1.shape[1]

    # hoisted [Ft, Gp, 1] GT views: reused by both the IoU and the matched-GT gather
    gx1b = gx1[:, :, None]; gy1b = gy1[:, :, None]
    gx2b = gx2[:, :, None]; gy2b = gy2[:, :, None]
    px1b = px1[:, None, :]; py1b = py1[:, None, :]
    px2b = px2[:, None, :]; py2b = py2[:, None, :]

    # ---- pairwise IoU [Ft, Gp, Pt]: GT on sublanes, predictions on lanes ----
    iw = jnp.maximum(jnp.minimum(px2b, gx2b) - jnp.maximum(px1b, gx1b), 0.0)
    ih = jnp.maximum(jnp.minimum(py2b, gy2b) - jnp.maximum(py1b, gy1b), 0.0)
    inter = iw * ih
    area_p = (px2 - px1) * (py2 - py1)                      # [Ft, Pt]
    area_g = (gx2 - gx1) * (gy2 - gy1)                      # [Ft, Gp]
    union = area_p[:, None, :] + area_g[:, :, None] - inter
    # exact divide kept on purpose: approx reciprocal could flip matches near 0.5
    iou = inter / jnp.maximum(union, EPS)
    iou = jnp.where(gv[:, :, None] > 0.5, iou, -1.0)        # padded GT never matches

    # ---- max / first-argmax over GT (sublane) axis (== torch .max(dim=1)) ----
    max_iou = jnp.max(iou, axis=1)                          # [Ft, Pt]
    g_iota = lax.broadcasted_iota(jnp.int32, iou.shape, 1).astype(jnp.float32)
    cand = jnp.where(iou >= max_iou[:, None, :], g_iota, jnp.float32(Gp))  # all-f32 (no i32 3D temp)
    best = jnp.min(cand, axis=1)                            # first index of the max
    sel = (g_iota == best[:, None, :]).astype(jnp.float32)  # [Ft, Gp, Pt] one-hot over GT

    # ---- gather matched GT box / class per prediction (exact VPU masked sums) ----
    # TODO(synk): could offload to the idle MXU via einsum('fcg,fgp->fcp'), but f32
    # matmul passes would round coordinates; kept on the VPU for exactness.
    mx1 = jnp.sum(sel * gx1b, axis=1)                       # [Ft, Pt]
    my1 = jnp.sum(sel * gy1b, axis=1)
    mx2 = jnp.sum(sel * gx2b, axis=1)
    my2 = jnp.sum(sel * gy2b, axis=1)
    mcl = jnp.sum(sel * gcl[:, :, None], axis=1)

    # ---- classification loss: BCE(one_hot(pred), one_hot(gt)) folded analytically ----
    cls_per = jnp.where(pc == mcl, jnp.float32(C_CLS_SAME), jnp.float32(C_CLS_DIFF))

    # ---- box loss: 1 - GIoU(pred_box, matched gt_box)  (2-D per-prediction work) ----
    jx1 = jnp.maximum(px1, mx1); jy1 = jnp.maximum(py1, my1)
    jx2 = jnp.minimum(px2, mx2); jy2 = jnp.minimum(py2, my2)
    jinter = jnp.maximum(jx2 - jx1, 0.0) * jnp.maximum(jy2 - jy1, 0.0)
    marea = (mx2 - mx1) * (my2 - my1)
    junion = area_p + marea - jinter
    jiou = jinter / jnp.maximum(junion, EPS)
    ex1 = jnp.minimum(px1, mx1); ey1 = jnp.minimum(py1, my1)
    ex2 = jnp.maximum(px2, mx2); ey2 = jnp.maximum(py2, my2)
    earea = (ex2 - ex1) * (ey2 - ey1)
    giou = jiou - (earea - junion) / jnp.maximum(earea, EPS)
    box_per = 1.0 - giou

    # ---- objectness loss: BCEWithLogits(score, 1) ----
    obj_per = jnp.maximum(ps, 0.0) - ps + jnp.log1p(jnp.exp(-jnp.abs(ps)))

    matched = jnp.logical_and(max_iou > 0.5, pv > 0.5).astype(jnp.float32)

    # ---- in-kernel reduction: fold [Ft, Pt] -> [1, 128] lane partials ----
    def fold(term):
        acc = term[:, 0:128]
        for c in range(1, Pt // 128):                       # static, small unroll
            acc = acc + term[:, c * 128:(c + 1) * 128]
        return jnp.sum(acc, axis=0, keepdims=True)          # [1, 128]

    rows = jnp.concatenate(
        [fold(matched * cls_per),
         fold(matched * box_per),
         fold(matched * obj_per),
         fold(matched),
         jnp.zeros((4, 128), jnp.float32)], axis=0)         # [8, 128] dense store
    out_ref[0, 0] = rows


def detection_loss(pred_boxes, pred_scores, pred_classes, pred_valid,
                   gt_boxes, gt_classes, gt_valid,
                   lambda_cls=1.0, lambda_box=1.0, lambda_obj=1.0,
                   frames_per_step=None, pred_tile=None,
                   vmem_budget_bytes=20 * 1024 * 1024):
    BF, P, _ = pred_boxes.shape
    G = gt_boxes.shape[1]

    # lane-dense prediction axis; second grid axis tiles P
    P_pad0 = ((max(P, 1) + 127) // 128) * 128
    if pred_tile is None:
        pred_tile = 512
    pred_tile = max(128, (int(pred_tile) // 128) * 128)
    pred_tile = min(pred_tile, P_pad0)
    P_pad = ((P_pad0 + pred_tile - 1) // pred_tile) * pred_tile
    n_p = P_pad // pred_tile

    G_pad = ((max(G, 1) + 7) // 8) * 8                      # GT lives on sublanes

    # frames per grid step: amortize ~0.35us/step but stay inside a conservative VMEM
    # budget (the ~10 live [Ft, G_pad, pred_tile] f32 temporaries dominate) and keep
    # >=2 frame-steps so the "parallel" axis can shard across v7x's two TensorCores.
    per_frame_bytes = 10 * G_pad * pred_tile * 4
    if frames_per_step is None:
        Ft = int(max(1, min(32, vmem_budget_bytes // per_frame_bytes)))
        if BF >= 2:
            Ft = min(Ft, max(1, BF // 2))
        Ft = min(Ft, max(1, BF))
    else:
        Ft = max(1, int(frames_per_step))
    BF_pad = ((max(BF, 1) + Ft - 1) // Ft) * Ft
    n_f = BF_pad // Ft

    f32 = jnp.float32

    def pack(boxes, extras, L, L_pad):
        # boxes [BF, L, 4] -> coordinate-major rows; extras each [BF, L] as one row
        x = jnp.concatenate(
            [jnp.transpose(boxes.astype(f32), (0, 2, 1))]
            + [e.astype(f32)[:, None, :] for e in extras], axis=1)
        return jnp.pad(x, ((0, BF_pad - BF), (0, 8 - x.shape[1]), (0, L_pad - L)))

    # class ids stored as f32 (exact for ids < 2^24, here < 80)
    pred_pack = pack(pred_boxes, [pred_scores, pred_classes, pred_valid], P, P_pad)
    gt_pack = pack(gt_boxes, [gt_classes, gt_valid], G, G_pad)

    partials = pl.pallas_call(
        detection_loss_kernel,
        out_shape=jax.ShapeDtypeStruct((n_f, n_p, 8, 128), jnp.float32),
        grid_spec=pltpu.PrefetchScalarGridSpec(
            num_scalar_prefetch=0,
            grid=(n_f, n_p),
            in_specs=[
                pl.BlockSpec((Ft, 8, pred_tile), lambda f, p: (f, 0, p)),
                pl.BlockSpec((Ft, 8, G_pad), lambda f, p: (f, 0, 0)),
            ],
            out_specs=pl.BlockSpec((1, 1, 8, 128), lambda f, p: (f, p, 0, 0)),
        ),
        compiler_params=pltpu.CompilerParams(
            dimension_semantics=("parallel", "parallel"),
            vmem_limit_bytes=32 * 1024 * 1024),
    )(pred_pack, gt_pack)

    # glue: tiny final reduction / normalization / lambda weighting
    sums = jnp.sum(partials, axis=(0, 1, 3))                # [8]; rows 0..3 used
    total = sums[3]
    denom = jnp.where(total > 0, total, 1.0)
    cls_loss = sums[0] / denom
    box_loss = sums[1] / denom
    obj_loss = sums[2] / denom
    loss = lambda_cls * cls_loss + lambda_box * box_loss + lambda_obj * obj_loss
    return {"loss": loss, "cls_loss": cls_loss,
            "box_loss": box_loss, "obj_loss": obj_loss}


# ---------------- pure numpy reference (mirrors the PyTorch loops) ----------------
def _ref_detection_loss(pb, ps, pc, pv, gb, gc, gv,
                        lambda_cls=1.0, lambda_box=1.0, lambda_obj=1.0):
    def bce(x, y):
        return np.maximum(x, 0.0) - x * y + np.log1p(np.exp(-np.abs(x)))

    def iou(a, b):
        iw = max(0.0, min(a[2], b[2]) - max(a[0], b[0]))
        ih = max(0.0, min(a[3], b[3]) - max(a[1], b[1]))
        inter = iw * ih
        ua = (a[2] - a[0]) * (a[3] - a[1]) + (b[2] - b[0]) * (b[3] - b[1]) - inter
        return inter / ua

    def giou(a, b):
        i = iou(a, b)
        inter = max(0.0, min(a[2], b[2]) - max(a[0], b[0])) * \
                max(0.0, min(a[3], b[3]) - max(a[1], b[1]))
        u = (a[2] - a[0]) * (a[3] - a[1]) + (b[2] - b[0]) * (b[3] - b[1]) - inter
        ex = max(a[2], b[2]) - min(a[0], b[0])
        ey = max(a[3], b[3]) - min(a[1], b[1])
        c = ex * ey
        return i - (c - u) / c

    cls_l = box_l = obj_l = 0.0
    total = 0
    for f in range(pb.shape[0]):
        vg = np.where(gv[f] > 0.5)[0]
        if vg.size == 0:
            continue
        for i in range(pb.shape[1]):
            if pv[f, i] <= 0.5:
                continue
            ious = np.array([iou(pb[f, i], gb[f, j]) for j in vg])
            jb = int(np.argmax(ious))
            if ious[jb] > 0.5:
                g = vg[jb]
                x = np.zeros(NUM_CLASSES, np.float32)
                x[int(pc[f, i])] = 1.0
                y = np.zeros(NUM_CLASSES, np.float32)
                y[int(gc[f, g])] = 1.0
                cls_l += float(bce(x, y).mean())
                box_l += float(1.0 - giou(pb[f, i], gb[f, g]))
                obj_l += float(bce(ps[f, i], 1.0))
                total += 1
    if total > 0:
        cls_l /= total
        box_l /= total
        obj_l /= total
    loss = lambda_cls * cls_l + lambda_box * box_l + lambda_obj * obj_l
    return {"loss": loss, "cls_loss": cls_l, "box_loss": box_l, "obj_loss": obj_l}


if __name__ == "__main__":
    B, F, P, G = 2, 2, 8, 8
    BF = B * F
    key = jax.random.PRNGKey(0)
    k1, k2, k3, k4, k5, k6, k7 = jax.random.split(key, 7)

    # ground-truth boxes (xyxy, positive area)
    gxy = jax.random.uniform(k1, (BF, G, 2), minval=0.0, maxval=50.0)
    gwh = jax.random.uniform(k2, (BF, G, 2), minval=8.0, maxval=20.0)
    gt_boxes = jnp.concatenate([gxy, gxy + gwh], axis=-1).astype(jnp.float32)
    gt_classes = jax.random.randint(k3, (BF, G), 0, NUM_CLASSES, dtype=jnp.int32)
    gt_counts = jnp.array([5, 0, 8, 3], dtype=jnp.int32)               # frame 1 has no GT
    gt_valid = (jnp.arange(G)[None, :] < gt_counts[:, None]).astype(jnp.float32)

    # predictions: perturbed GT boxes (so some matches have IoU > 0.5), plus far-off ones
    noise = 0.8 * jax.random.normal(k4, (BF, P, 4))
    pred_boxes = gt_boxes + noise
    far = (jnp.arange(P)[None, :, None] >= 6).astype(jnp.float32) * 100.0  # last 2 preds far away
    pred_boxes = (pred_boxes + far).astype(jnp.float32)
    pred_scores = jax.random.normal(k5, (BF, P)).astype(jnp.float32)
    rand_cls = jax.random.randint(k6, (BF, P), 0, NUM_CLASSES, dtype=jnp.int32)
    same = jax.random.bernoulli(k7, 0.5, (BF, P))
    pred_classes = jnp.where(same, gt_classes, rand_cls).astype(jnp.int32)
    pred_counts = jnp.array([8, 6, 4, 8], dtype=jnp.int32)
    pred_valid = (jnp.arange(P)[None, :] < pred_counts[:, None]).astype(jnp.float32)

    out = detection_loss(pred_boxes, pred_scores, pred_classes, pred_valid,
                         gt_boxes, gt_classes, gt_valid)
    out = jax.tree_util.tree_map(jax.block_until_ready, out)

    ref = _ref_detection_loss(np.asarray(pred_boxes), np.asarray(pred_scores),
                              np.asarray(pred_classes), np.asarray(pred_valid),
                              np.asarray(gt_boxes), np.asarray(gt_classes),
                              np.asarray(gt_valid))

    for k in ("loss", "cls_loss", "box_loss", "obj_loss"):
        np.testing.assert_allclose(float(out[k]), ref[k], rtol=1e-4, atol=1e-5)

    print("KERNEL_OK")
</pallas_src>

<mosaic_0001>
module attributes {stable_mosaic.version = 11 : i64} {
  func.func @detection_loss_kernel(%arg0: i32, %arg1: i32, %arg2: memref<2x8x128xf32, #tpu.memory_space<vmem>>, %arg3: memref<2x8x8xf32, #tpu.memory_space<vmem>>, %arg4: memref<1x1x8x128xf32, #tpu.memory_space<vmem>>) attributes {dimension_semantics = [#tpu.dimension_semantics<parallel>, #tpu.dimension_semantics<parallel>], iteration_bounds = array<i64: 2, 1>, scalar_prefetch = 0 : i64, scratch_operands = 0 : i64, tpu.core_type = #tpu.core_type<tc>, window_params = [{transform_indices = @transform_0, window_bounds = array<i64: 2, 8, 128>}, {transform_indices = @transform_1, window_bounds = array<i64: 2, 8, 8>}, {transform_indices = @transform_2, window_bounds = array<i64: 1, 1, 8, 128>}]} {
    %c0 = arith.constant 0 : index
    %c0_0 = arith.constant 0 : index
    %c0_1 = arith.constant 0 : index
    %0 = vector.load %arg2[%c0, %c0_0, %c0_1] : memref<2x8x128xf32, #tpu.memory_space<vmem>>, vector<2x1x128xf32>
    %1 = vector.shape_cast %0 : vector<2x1x128xf32> to vector<2x128xf32>
    %c0_2 = arith.constant 0 : index
    %c1 = arith.constant 1 : index
    %c0_3 = arith.constant 0 : index
    %2 = vector.load %arg2[%c0_2, %c1, %c0_3] : memref<2x8x128xf32, #tpu.memory_space<vmem>>, vector<2x1x128xf32>
    %3 = vector.shape_cast %2 : vector<2x1x128xf32> to vector<2x128xf32>
    %c0_4 = arith.constant 0 : index
    %c2 = arith.constant 2 : index
    %c0_5 = arith.constant 0 : index
    %4 = vector.load %arg2[%c0_4, %c2, %c0_5] : memref<2x8x128xf32, #tpu.memory_space<vmem>>, vector<2x1x128xf32>
    %5 = vector.shape_cast %4 : vector<2x1x128xf32> to vector<2x128xf32>
    %c0_6 = arith.constant 0 : index
    %c3 = arith.constant 3 : index
    %c0_7 = arith.constant 0 : index
    %6 = vector.load %arg2[%c0_6, %c3, %c0_7] : memref<2x8x128xf32, #tpu.memory_space<vmem>>, vector<2x1x128xf32>
    %7 = vector.shape_cast %6 : vector<2x1x128xf32> to vector<2x128xf32>
    %c0_8 = arith.constant 0 : index
    %c4 = arith.constant 4 : index
    %c0_9 = arith.constant 0 : index
    %8 = vector.load %arg2[%c0_8, %c4, %c0_9] : memref<2x8x128xf32, #tpu.memory_space<vmem>>, vector<2x1x128xf32>
    %9 = vector.shape_cast %8 : vector<2x1x128xf32> to vector<2x128xf32>
    %c0_10 = arith.constant 0 : index
    %c5 = arith.constant 5 : index
    %c0_11 = arith.constant 0 : index
    %10 = vector.load %arg2[%c0_10, %c5, %c0_11] : memref<2x8x128xf32, #tpu.memory_space<vmem>>, vector<2x1x128xf32>
    %11 = vector.shape_cast %10 : vector<2x1x128xf32> to vector<2x128xf32>
    %c0_12 = arith.constant 0 : index
    %c6 = arith.constant 6 : index
    %c0_13 = arith.constant 0 : index
    %12 = vector.load %arg2[%c0_12, %c6, %c0_13] : memref<2x8x128xf32, #tpu.memory_space<vmem>>, vector<2x1x128xf32>
    %13 = vector.shape_cast %12 : vector<2x1x128xf32> to vector<2x128xf32>
    %c0_14 = arith.constant 0 : index
    %c0_15 = arith.constant 0 : index
    %c0_16 = arith.constant 0 : index
    %14 = vector.load %arg3[%c0_14, %c0_15, %c0_16] : memref<2x8x8xf32, #tpu.memory_space<vmem>>, vector<2x1x8xf32>
    %15 = vector.shape_cast %14 : vector<2x1x8xf32> to vector<2x8xf32>
    %c0_17 = arith.constant 0 : index
    %c1_18 = arith.constant 1 : index
    %c0_19 = arith.constant 0 : index
    %16 = vector.load %arg3[%c0_17, %c1_18, %c0_19] : memref<2x8x8xf32, #tpu.memory_space<vmem>>, vector<2x1x8xf32>
    %17 = vector.shape_cast %16 : vector<2x1x8xf32> to vector<2x8xf32>
    %c0_20 = arith.constant 0 : index
    %c2_21 = arith.constant 2 : index
    %c0_22 = arith.constant 0 : index
    %18 = vector.load %arg3[%c0_20, %c2_21, %c0_22] : memref<2x8x8xf32, #tpu.memory_space<vmem>>, vector<2x1x8xf32>
    %19 = vector.shape_cast %18 : vector<2x1x8xf32> to vector<2x8xf32>
    %c0_23 = arith.constant 0 : index
    %c3_24 = arith.constant 3 : index
    %c0_25 = arith.constant 0 : index
    %20 = vector.load %arg3[%c0_23, %c3_24, %c0_25] : memref<2x8x8xf32, #tpu.memory_space<vmem>>, vector<2x1x8xf32>
    %21 = vector.shape_cast %20 : vector<2x1x8xf32> to vector<2x8xf32>
    %c0_26 = arith.constant 0 : index
    %c4_27 = arith.constant 4 : index
    %c0_28 = arith.constant 0 : index
    %22 = vector.load %arg3[%c0_26, %c4_27, %c0_28] : memref<2x8x8xf32, #tpu.memory_space<vmem>>, vector<2x1x8xf32>
    %23 = vector.shape_cast %22 : vector<2x1x8xf32> to vector<2x8xf32>
    %c0_29 = arith.constant 0 : index
    %c5_30 = arith.constant 5 : index
    %c0_31 = arith.constant 0 : index
    %24 = vector.load %arg3[%c0_29, %c5_30, %c0_31] : memref<2x8x8xf32, #tpu.memory_space<vmem>>, vector<2x1x8xf32>
    %25 = vector.shape_cast %24 : vector<2x1x8xf32> to vector<2x8xf32>
    %26 = vector.shape_cast %15 : vector<2x8xf32> to vector<2x8x1xf32>
    %27 = vector.shape_cast %17 : vector<2x8xf32> to vector<2x8x1xf32>
    %28 = vector.shape_cast %19 : vector<2x8xf32> to vector<2x8x1xf32>
    %29 = vector.shape_cast %21 : vector<2x8xf32> to vector<2x8x1xf32>
    %30 = vector.shape_cast %1 : vector<2x128xf32> to vector<2x1x128xf32>
    %31 = vector.shape_cast %3 : vector<2x128xf32> to vector<2x1x128xf32>
    %32 = vector.shape_cast %5 : vector<2x128xf32> to vector<2x1x128xf32>
    %33 = vector.shape_cast %7 : vector<2x128xf32> to vector<2x1x128xf32>
    %34 = vector.broadcast %32 : vector<2x1x128xf32> to vector<2x8x128xf32>
    %35 = vector.broadcast %28 : vector<2x8x1xf32> to vector<2x8x128xf32>
    %36 = arith.minimumf %34, %35 : vector<2x8x128xf32>
    %37 = vector.broadcast %30 : vector<2x1x128xf32> to vector<2x8x128xf32>
    %38 = vector.broadcast %26 : vector<2x8x1xf32> to vector<2x8x128xf32>
    %39 = arith.maximumf %37, %38 : vector<2x8x128xf32>
    %40 = arith.subf %36, %39 : vector<2x8x128xf32>
    %cst = arith.constant 0.000000e+00 : f32
    %41 = vector.broadcast %cst : f32 to vector<2x8x128xf32>
    %42 = arith.maximumf %40, %41 : vector<2x8x128xf32>
    %43 = vector.broadcast %33 : vector<2x1x128xf32> to vector<2x8x128xf32>
    %44 = vector.broadcast %29 : vector<2x8x1xf32> to vector<2x8x128xf32>
    %45 = arith.minimumf %43, %44 : vector<2x8x128xf32>
    %46 = vector.broadcast %31 : vector<2x1x128xf32> to vector<2x8x128xf32>
    %47 = vector.broadcast %27 : vector<2x8x1xf32> to vector<2x8x128xf32>
    %48 = arith.maximumf %46, %47 : vector<2x8x128xf32>
    %49 = arith.subf %45, %48 : vector<2x8x128xf32>
    %cst_32 = arith.constant 0.000000e+00 : f32
    %50 = vector.broadcast %cst_32 : f32 to vector<2x8x128xf32>
    %51 = arith.maximumf %49, %50 : vector<2x8x128xf32>
    %52 = arith.mulf %42, %51 : vector<2x8x128xf32>
    %53 = arith.subf %5, %1 : vector<2x128xf32>
    %54 = arith.subf %7, %3 : vector<2x128xf32>
    %55 = arith.mulf %53, %54 : vector<2x128xf32>
    %56 = arith.subf %19, %15 : vector<2x8xf32>
    %57 = arith.subf %21, %17 : vector<2x8xf32>
    %58 = arith.mulf %56, %57 : vector<2x8xf32>
    %59 = vector.shape_cast %55 : vector<2x128xf32> to vector<2x1x128xf32>
    %60 = vector.shape_cast %58 : vector<2x8xf32> to vector<2x8x1xf32>
    %61 = vector.broadcast %59 : vector<2x1x128xf32> to vector<2x8x128xf32>
    %62 = vector.broadcast %60 : vector<2x8x1xf32> to vector<2x8x128xf32>
    %63 = arith.addf %61, %62 : vector<2x8x128xf32>
    %64 = arith.subf %63, %52 : vector<2x8x128xf32>
    %cst_33 = arith.constant 9.99999996E-13 : f32
    %65 = vector.broadcast %cst_33 : f32 to vector<2x8x128xf32>
    %66 = arith.maximumf %64, %65 : vector<2x8x128xf32>
    %67 = arith.divf %52, %66 : vector<2x8x128xf32>
    %68 = vector.shape_cast %25 : vector<2x8xf32> to vector<2x8x1xf32>
    %cst_34 = arith.constant 5.000000e-01 : f32
    %69 = vector.broadcast %cst_34 : f32 to vector<2x8x1xf32>
    %70 = arith.cmpf ogt, %68, %69 : vector<2x8x1xf32>
    %cst_35 = arith.constant -1.000000e+00 : f32
    %71 = vector.shape_cast %70 : vector<2x8x1xi1> to vector<2x8x1xi1>
    %72 = vector.broadcast %71 : vector<2x8x1xi1> to vector<2x8x128xi1>
    %73 = vector.broadcast %cst_35 : f32 to vector<2x8x128xf32>
    %74 = arith.select %72, %67, %73 : vector<2x8x128xi1>, vector<2x8x128xf32>
    %cst_36 = arith.constant dense<0xFF800000> : vector<2x128xf32>
    %75 = vector.multi_reduction <maximumf>, %74, %cst_36 [1] : vector<2x8x128xf32> to vector<2x128xf32>
    %76 = tpu.iota {dimensions = array<i32: 1>} : vector<2x8x128xi32>
    %77 = arith.sitofp %76 : vector<2x8x128xi32> to vector<2x8x128xf32>
    %78 = vector.shape_cast %75 : vector<2x128xf32> to vector<2x1x128xf32>
    %79 = vector.broadcast %78 : vector<2x1x128xf32> to vector<2x8x128xf32>
    %80 = arith.cmpf oge, %74, %79 : vector<2x8x128xf32>
    %cst_37 = arith.constant 8.000000e+00 : f32
    %81 = vector.broadcast %cst_37 : f32 to vector<2x8x128xf32>
    %82 = arith.select %80, %77, %81 : vector<2x8x128xi1>, vector<2x8x128xf32>
    %cst_38 = arith.constant dense<0x7F800000> : vector<2x128xf32>
    %83 = vector.multi_reduction <minimumf>, %82, %cst_38 [1] : vector<2x8x128xf32> to vector<2x128xf32>
    %84 = vector.shape_cast %83 : vector<2x128xf32> to vector<2x1x128xf32>
    %85 = vector.broadcast %84 : vector<2x1x128xf32> to vector<2x8x128xf32>
    %86 = arith.cmpf oeq, %77, %85 : vector<2x8x128xf32>
    %87 = arith.extui %86 : vector<2x8x128xi1> to vector<2x8x128xi32>
    %88 = arith.sitofp %87 : vector<2x8x128xi32> to vector<2x8x128xf32>
    %89 = vector.broadcast %26 : vector<2x8x1xf32> to vector<2x8x128xf32>
    %90 = arith.mulf %88, %89 : vector<2x8x128xf32>
    %cst_39 = arith.constant dense<0.000000e+00> : vector<2x128xf32>
    %91 = vector.multi_reduction <add>, %90, %cst_39 [1] : vector<2x8x128xf32> to vector<2x128xf32>
    %92 = vector.broadcast %27 : vector<2x8x1xf32> to vector<2x8x128xf32>
    %93 = arith.mulf %88, %92 : vector<2x8x128xf32>
    %cst_40 = arith.constant dense<0.000000e+00> : vector<2x128xf32>
    %94 = vector.multi_reduction <add>, %93, %cst_40 [1] : vector<2x8x128xf32> to vector<2x128xf32>
    %95 = vector.broadcast %28 : vector<2x8x1xf32> to vector<2x8x128xf32>
    %96 = arith.mulf %88, %95 : vector<2x8x128xf32>
    %cst_41 = arith.constant dense<0.000000e+00> : vector<2x128xf32>
    %97 = vector.multi_reduction <add>, %96, %cst_41 [1] : vector<2x8x128xf32> to vector<2x128xf32>
    %98 = vector.broadcast %29 : vector<2x8x1xf32> to vector<2x8x128xf32>
    %99 = arith.mulf %88, %98 : vector<2x8x128xf32>
    %cst_42 = arith.constant dense<0.000000e+00> : vector<2x128xf32>
    %100 = vector.multi_reduction <add>, %99, %cst_42 [1] : vector<2x8x128xf32> to vector<2x128xf32>
    %101 = vector.shape_cast %23 : vector<2x8xf32> to vector<2x8x1xf32>
    %102 = vector.broadcast %101 : vector<2x8x1xf32> to vector<2x8x128xf32>
    %103 = arith.mulf %88, %102 : vector<2x8x128xf32>
    %cst_43 = arith.constant dense<0.000000e+00> : vector<2x128xf32>
    %104 = vector.multi_reduction <add>, %103, %cst_43 [1] : vector<2x8x128xf32> to vector<2x128xf32>
    %105 = arith.cmpf oeq, %11, %104 : vector<2x128xf32>
    %cst_44 = arith.constant 0.6883986 : f32
    %cst_45 = arith.constant 0.700898587 : f32
    %106 = vector.broadcast %cst_44 : f32 to vector<2x128xf32>
    %107 = vector.broadcast %cst_45 : f32 to vector<2x128xf32>
    %108 = arith.select %105, %106, %107 : vector<2x128xi1>, vector<2x128xf32>
    %109 = arith.maximumf %1, %91 : vector<2x128xf32>
    %110 = arith.maximumf %3, %94 : vector<2x128xf32>
    %111 = arith.minimumf %5, %97 : vector<2x128xf32>
    %112 = arith.minimumf %7, %100 : vector<2x128xf32>
    %113 = arith.subf %111, %109 : vector<2x128xf32>
    %cst_46 = arith.constant 0.000000e+00 : f32
    %114 = vector.broadcast %cst_46 : f32 to vector<2x128xf32>
    %115 = arith.maximumf %113, %114 : vector<2x128xf32>
    %116 = arith.subf %112, %110 : vector<2x128xf32>
    %cst_47 = arith.constant 0.000000e+00 : f32
    %117 = vector.broadcast %cst_47 : f32 to vector<2x128xf32>
    %118 = arith.maximumf %116, %117 : vector<2x128xf32>
    %119 = arith.mulf %115, %118 : vector<2x128xf32>
    %120 = arith.subf %97, %91 : vector<2x128xf32>
    %121 = arith.subf %100, %94 : vector<2x128xf32>
    %122 = arith.mulf %120, %121 : vector<2x128xf32>
    %123 = arith.addf %55, %122 : vector<2x128xf32>
    %124 = arith.subf %123, %119 : vector<2x128xf32>
    %cst_48 = arith.constant 9.99999996E-13 : f32
    %125 = vector.broadcast %cst_48 : f32 to vector<2x128xf32>
    %126 = arith.maximumf %124, %125 : vector<2x128xf32>
    %127 = arith.divf %119, %126 : vector<2x128xf32>
    %128 = arith.minimumf %1, %91 : vector<2x128xf32>
    %129 = arith.minimumf %3, %94 : vector<2x128xf32>
    %130 = arith.maximumf %5, %97 : vector<2x128xf32>
    %131 = arith.maximumf %7, %100 : vector<2x128xf32>
    %132 = arith.subf %130, %128 : vector<2x128xf32>
    %133 = arith.subf %131, %129 : vector<2x128xf32>
    %134 = arith.mulf %132, %133 : vector<2x128xf32>
    %135 = arith.subf %134, %124 : vector<2x128xf32>
    %cst_49 = arith.constant 9.99999996E-13 : f32
    %136 = vector.broadcast %cst_49 : f32 to vector<2x128xf32>
    %137 = arith.maximumf %134, %136 : vector<2x128xf32>
    %138 = arith.divf %135, %137 : vector<2x128xf32>
    %139 = arith.subf %127, %138 : vector<2x128xf32>
    %cst_50 = arith.constant 1.000000e+00 : f32
    %140 = vector.broadcast %cst_50 : f32 to vector<2x128xf32>
    %141 = arith.subf %140, %139 : vector<2x128xf32>
    %cst_51 = arith.constant 0.000000e+00 : f32
    %142 = vector.broadcast %cst_51 : f32 to vector<2x128xf32>
    %143 = arith.maximumf %9, %142 : vector<2x128xf32>
    %144 = arith.subf %143, %9 : vector<2x128xf32>
    %145 = math.absf %9 : vector<2x128xf32>
    %cst_52 = arith.constant 0.000000e+00 : f32
    %146 = vector.broadcast %cst_52 : f32 to vector<2x128xf32>
    %147 = arith.subf %146, %145 : vector<2x128xf32>
    %148 = math.exp %147 : vector<2x128xf32>
    %149 = math.log1p %148 : vector<2x128xf32>
    %150 = arith.addf %144, %149 : vector<2x128xf32>
    %cst_53 = arith.constant 5.000000e-01 : f32
    %151 = vector.broadcast %cst_53 : f32 to vector<2x128xf32>
    %152 = arith.cmpf ogt, %75, %151 : vector<2x128xf32>
    %cst_54 = arith.constant 5.000000e-01 : f32
    %153 = vector.broadcast %cst_54 : f32 to vector<2x128xf32>
    %154 = arith.cmpf ogt, %13, %153 : vector<2x128xf32>
    %155 = arith.andi %152, %154 : vector<2x128xi1>
    %156 = arith.extui %155 : vector<2x128xi1> to vector<2x128xi32>
    %157 = arith.sitofp %156 : vector<2x128xi32> to vector<2x128xf32>
    %158 = arith.mulf %157, %108 : vector<2x128xf32>
    %cst_55 = arith.constant dense<0.000000e+00> : vector<128xf32>
    %159 = vector.multi_reduction <add>, %158, %cst_55 [0] : vector<2x128xf32> to vector<128xf32>
    %160 = vector.shape_cast %159 : vector<128xf32> to vector<1x128xf32>
    %161 = arith.mulf %157, %141 : vector<2x128xf32>
    %cst_56 = arith.constant dense<0.000000e+00> : vector<128xf32>
    %162 = vector.multi_reduction <add>, %161, %cst_56 [0] : vector<2x128xf32> to vector<128xf32>
    %163 = vector.shape_cast %162 : vector<128xf32> to vector<1x128xf32>
    %164 = arith.mulf %157, %150 : vector<2x128xf32>
    %cst_57 = arith.constant dense<0.000000e+00> : vector<128xf32>
    %165 = vector.multi_reduction <add>, %164, %cst_57 [0] : vector<2x128xf32> to vector<128xf32>
    %166 = vector.shape_cast %165 : vector<128xf32> to vector<1x128xf32>
    %cst_58 = arith.constant dense<0.000000e+00> : vector<128xf32>
    %167 = vector.multi_reduction <add>, %157, %cst_58 [0] : vector<2x128xf32> to vector<128xf32>
    %168 = vector.shape_cast %167 : vector<128xf32> to vector<1x128xf32>
    %cst_59 = arith.constant 0.000000e+00 : f32
    %169 = vector.broadcast %cst_59 : f32 to vector<4x128xf32>
    %170 = tpu.concatenate %160, %163, %166, %168, %169 in 0 : vector<1x128xf32>, vector<1x128xf32>, vector<1x128xf32>, vector<1x128xf32>, vector<4x128xf32> -> vector<8x128xf32>
    %c0_60 = arith.constant 0 : index
    %c0_61 = arith.constant 0 : index
    %c0_62 = arith.constant 0 : index
    %c0_63 = arith.constant 0 : index
    %171 = vector.load %arg4[%c0_60, %c0_61, %c0_62, %c0_63] : memref<1x1x8x128xf32, #tpu.memory_space<vmem>>, vector<1x1x8x128xf32>
    %172 = vector.shape_cast %171 : vector<1x1x8x128xf32> to vector<8x128xf32>
    %173 = vector.shape_cast %170 : vector<8x128xf32> to vector<1x1x8x128xf32>
    tpu.vector_store %arg4[%c0_60, %c0_61, %c0_62, %c0_63], %173 {strides = array<i32>} : memref<1x1x8x128xf32, #tpu.memory_space<vmem>>, vector<1x1x8x128xf32>,
    return
  }
  func.func @transform_0(%arg0: i32, %arg1: i32) -> (i32, i32, i32) {
    %c0_i32 = arith.constant 0 : i32
    %c0_i32_0 = arith.constant 0 : i32
    return %arg0, %c0_i32, %arg1 : i32, i32, i32
  }
  func.func @transform_1(%arg0: i32, %arg1: i32) -> (i32, i32, i32) {
    %c0_i32 = arith.constant 0 : i32
    %c0_i32_0 = arith.constant 0 : i32
    %c0_i32_1 = arith.constant 0 : i32
    return %arg0, %c0_i32, %c0_i32_0 : i32, i32, i32
  }
  func.func @transform_2(%arg0: i32, %arg1: i32) -> (i32, i32, i32, i32) {
    %c0_i32 = arith.constant 0 : i32
    %c0_i32_0 = arith.constant 0 : i32
    %c0_i32_1 = arith.constant 0 : i32
    return %arg0, %arg1, %c0_i32, %c0_i32_0 : i32, i32, i32, i32
  }
}

</mosaic_0001>

<llo_original>
// kernel: tpu_custom_call.1
$region0: #{tpu_custom_call.1}
  #allocation0 [shape = 'u32[]', space=smem, size = 0x4, offset = 0x4, fixed_abs, tag = 'smem constant byte address 0x4 - core index']
  #allocation1 [shape = 'u32[144,128]{1,0:T(1,128)}', space=vmem, size = 0x12000, scoped, tag = 'internal scratch']
  %s0 = inlined_call_operand.hbm [shape: f32[4,8,128], index: 0, kind: input, shape index: {}]
  %s1 = inlined_call_operand.hbm [shape: f32[4,8,8], index: 1, kind: input, shape index: {}]
  %s2 = inlined_call_operand.hbm [shape: f32[2,1,8,128], index: 2, kind: output, shape index: {}]
  %s3 = sld [smem:[#allocation0]]
  $region49: #{tpu_custom_call.1} parent=0
    _
  %s5 = ssub.s32 1, %s3
  %s6 = scalar_select 0, %s5, %s3
  $region1: #{tpu_custom_call.1} parent=0
    #allocation2 [shape = 'u8[16384]{0}', space=vmem, size = 0x4000, scoped, tag = 'input window, operand 0']
    #allocation3 [shape = 's32[2]{0}', space=sflag, size = 0x8, scoped, tag = 'scoped memory for tpu_custom_call.1']
    #allocation4 [shape = 's32[2]{0}', space=sflag, size = 0x8, scoped, tag = 'scoped memory for tpu_custom_call.1']
    #allocation5 [shape = 'u8[16384]{0}', space=vmem, size = 0x4000, scoped, tag = 'input window, operand 1']
    #allocation6 [shape = 's32[2]{0}', space=sflag, size = 0x8, scoped, tag = 'scoped memory for tpu_custom_call.1']
    #allocation7 [shape = 'u8[8192]{0}', space=vmem, size = 0x2000, scoped, tag = 'output window, operand 0']
    %7 = vsyncpa [#allocation3], 0
    %s8 = scalar_lea.sflag [#allocation3], 1
    %9 = vsyncpa %s8, 0
    %10 = vsyncpa [#allocation6], 0
    %s11 = scalar_lea.sflag [#allocation6], 1
    %12 = vsyncpa %s11, 0
    %13 = vsyncpa [#allocation4], 0
    %s14 = scalar_lea.sflag [#allocation4], 1
    %15 = vsyncpa %s14, 0
    loop: start=0, step=1, limit=4
    $region2: #{tpu_custom_call.1} parent=1 // loop_pre_header
      _
    $region3: #{tpu_custom_call.1} parent=1 // loop_header
      %s17 = sphi 0, %s21
      %p18 = scmp.ge.s32.totalorder %s17, 4
      %s24 = sphi 0, %s36
      %s25 = sphi 0, %s32
      %s26 = sphi 0, %s24
      %s27 = sphi 0, %s25
      %s28 = sphi 0, %s26
      %s29 = sphi 0, %s27
      %s41 = sphi 0, %s43
      %s44 = sphi 0, %s41
      %s45 = sphi 0, %s44
      %s61 = sphi 0, %s45
      %s67 = sphi 0, %s69
      %s70 = sphi 0, %s67
      %s71 = sphi 0, %s70
      %s87 = sphi 0, %s71
      %s95 = sphi 0, %s97
      %s98 = sphi 0, %s95
      %s99 = sphi 0, %s98
      %s115 = sphi 0, %s99
    $region4: #{tpu_custom_call.1} parent=1 // loop_header_branch
      %20 = sbr.rel (%p18) target = $region8
    $region5: #{tpu_custom_call.1} parent=1 // loop_body
      %s22 = ssub.s32 %s17, 1
      %s23 = ssub.s32 %s17, 2
      %s30 = sadd.s32 1, %s25
      %p31 = scmp.ge.s32.totalorder %s30, 1
      %s32 = scalar_select %p31, 0, %s30
      %s33 = sadd.s32 1, %s24
      %s34 = scalar_select %p31, %s33, %s24
      %p35 = scmp.ge.s32.totalorder %s34, 2
      %s36 = scalar_select %p35, 0, %s34
      %s37 = ssub.s32 %s24, %s36
      %s38 = ssub.s32 %s25, %s32
      %s39 = sor.u32 %s37, %s38
      %p40 = scmp.eq.s32.totalorder %s39, 0
      %s42 = sadd.s32 %s41, 1
      %s43 = scalar_select %p40, %s41, %s42
      %p46 = pneg %p40
      %p47 = scmp.eq.s32.totalorder %s17, 1
      %p48 = por %p46, %p47
      %p49 = scmp.ne.s32.totalorder %s41, %s44
      %p50 = scmp.eq.s32.totalorder %s17, 0
      %p51 = por %p49, %p50
      %p52 = scmp.ne.s32.totalorder %s41, %s44
      %p53 = scmp.eq.s32.totalorder %s22, 1
      %p54 = por %p52, %p53
      %p55 = scmp.ne.s32.totalorder %s44, %s45
      %p56 = scmp.eq.s32.totalorder %s22, 0
      %p57 = por %p55, %p56
      %p58 = scmp.ne.s32.totalorder %s44, %s45
      %p59 = scmp.eq.s32.totalorder %s23, 1
      %p60 = por %p58, %p59
      %p62 = scmp.ne.s32.totalorder %s45, %s61
      %p63 = scmp.eq.s32.totalorder %s23, 0
      %p64 = por %p62, %p63
      %s65 = ssub.s32 %s24, %s36
      %p66 = scmp.eq.s32.totalorder %s65, 0
      %s68 = sadd.s32 %s67, 1
      %s69 = scalar_select %p66, %s67, %s68
      %p72 = pneg %p66
      %p73 = scmp.eq.s32.totalorder %s17, 1
      %p74 = por %p72, %p73
      %p75 = scmp.ne.s32.totalorder %s67, %s70
      %p76 = scmp.eq.s32.totalorder %s17, 0
      %p77 = por %p75, %p76
      %p78 = scmp.ne.s32.totalorder %s67, %s70
      %p79 = scmp.eq.s32.totalorder %s22, 1
      %p80 = por %p78, %p79
      %p81 = scmp.ne.s32.totalorder %s70, %s71
      %p82 = scmp.eq.s32.totalorder %s22, 0
      %p83 = por %p81, %p82
      %p84 = scmp.ne.s32.totalorder %s70, %s71
      %p85 = scmp.eq.s32.totalorder %s23, 1
      %p86 = por %p84, %p85
      %p88 = scmp.ne.s32.totalorder %s71, %s87
      %p89 = scmp.eq.s32.totalorder %s23, 0
      %p90 = por %p88, %p89
      %s91 = ssub.s32 %s24, %s36
      %s92 = ssub.s32 %s25, %s32
      %s93 = sor.u32 %s91, %s92
      %p94 = scmp.eq.s32.totalorder %s93, 0
      %s96 = sadd.s32 %s95, 1
      %s97 = scalar_select %p94, %s95, %s96
      %p100 = pneg %p94
      %p101 = scmp.eq.s32.totalorder %s17, 1
      %p102 = por %p100, %p101
      %p103 = scmp.ne.s32.totalorder %s95, %s98
      %p104 = scmp.eq.s32.totalorder %s17, 0
      %p105 = por %p103, %p104
      %p106 = scmp.ne.s32.totalorder %s95, %s98
      %p107 = scmp.eq.s32.totalorder %s22, 1
      %p108 = por %p106, %p107
      %p109 = scmp.ne.s32.totalorder %s98, %s99
      %p110 = scmp.eq.s32.totalorder %s22, 0
      %p111 = por %p109, %p110
      %p112 = scmp.ne.s32.totalorder %s98, %s99
      %p113 = scmp.eq.s32.totalorder %s23, 1
      %p114 = por %p112, %p113
      %p116 = scmp.ne.s32.totalorder %s99, %s115
      %p117 = scmp.eq.s32.totalorder %s23, 0
      %p118 = por %p116, %p117
      %p119 = scmp.le.s32.totalorder 1, %s17
      %p120 = scmp.lt.s32.totalorder %s17, 3
      %p121 = pnand %p119, %p120
      %p122 = pneg %p121
      // Predicated region
      $region9: #{tpu_custom_call.1} parent=5 // pred_check
        _
      $region10: #{tpu_custom_call.1} parent=5 // pred_check_branch
        %124 = sbr.rel (%p121) target = $region12
      $region11: #{tpu_custom_call.1} parent=5 // pred_region
        %s125 = ssub.s32 %s17, 1
      $region12: #{tpu_custom_call.1} parent=5 // pred_fallthru
        _
      %p126 = scmp.lt.s32.totalorder %s17, 2
      // Predicated region
      $region13: #{tpu_custom_call.1} parent=5 // pred_check
        %p127 = pneg %p126
      $region14: #{tpu_custom_call.1} parent=5 // pred_check_branch
        %129 = sbr.rel (%p127) target = $region16
      $region15: #{tpu_custom_call.1} parent=5 // pred_region
        // Predicated region
        $region17: #{tpu_custom_call.1} parent=15 // pred_check
          %p130 = pneg %p51
        $region18: #{tpu_custom_call.1} parent=15 // pred_check_branch
          %132 = sbr.rel (%p130) target = $region20
        $region19: #{tpu_custom_call.1} parent=15 // pred_region
          %s133 = sand.u32 %s41, 1
          %s134 = scalar_lea.sflag [#allocation3], %s133
          %s135 = sand.u32 %s41, 1
          %s136 = smul.addr %s135, 16
          %s137 = scalar_lea.vmem [#allocation2], %s136
          %s138 = smul.u32 2, %s24
          %s140 = ssub.s32 256, 256
          %141 = vsyncadd %s134, %s140
          %s142 = sadd.s32 %s25, %s138
          %s143 = smul.addr %s142, 128
          %s144 = scalar_lea.hbm %s0, %s143
          %s145 = sshll.u32 %s137, 4
          %s146 = int_to_ptr.vmem [resolvable:$true] %s145
          %151 = dma.hbm_to_vmem [thread:$0]  %s144, 256, %s146, %s134, 128, 128, 8
        $region20: #{tpu_custom_call.1} parent=15 // pred_fallthru
          _
        // Predicated region
        $region21: #{tpu_custom_call.1} parent=15 // pred_check
          %p152 = pneg %p77
        $region22: #{tpu_custom_call.1} parent=15 // pred_check_branch
          %154 = sbr.rel (%p152) target = $region24
        $region23: #{tpu_custom_call.1} parent=15 // pred_region
          %s155 = sand.u32 %s67, 1
          %s156 = scalar_lea.sflag [#allocation6], %s155
          %s157 = sand.u32 %s67, 1
          %s158 = smul.addr %s157, 16
          %s159 = scalar_lea.vmem [#allocation5], %s158
          %s160 = smul.u32 2, %s24
          %s162 = ssub.s32 256, 256
          %163 = vsyncadd %s156, %s162
          %s164 = smul.addr %s160, 128
          %s165 = scalar_lea.hbm %s1, %s164
          %s166 = sshll.u32 %s159, 4
          %s167 = int_to_ptr.vmem [resolvable:$true] %s166
          %172 = dma.hbm_to_vmem [thread:$0]  %s165, 256, %s167, %s156, 128, 128, 8
        $region24: #{tpu_custom_call.1} parent=15 // pred_fallthru
          _
      $region16: #{tpu_custom_call.1} parent=5 // pred_fallthru
        _
      %p173 = scmp.le.s32.totalorder 1, %s17
      %p174 = scmp.lt.s32.totalorder %s17, 3
      %p175 = pnand %p173, %p174
      %p176 = pneg %p175
      // Predicated region
      $region25: #{tpu_custom_call.1} parent=5 // pred_check
        _
      $region26: #{tpu_custom_call.1} parent=5 // pred_check_branch
        %178 = sbr.rel (%p175) target = $region28
      $region27: #{tpu_custom_call.1} parent=5 // pred_region
        %s179 = ssub.s32 %s17, 1
        %s180 = sand.u32 %s44, 1
        %s181 = scalar_lea.sflag [#allocation3], %s180
        %s182 = sand.u32 %s44, 1
        %s183 = smul.addr %s182, 16
        %s184 = scalar_lea.vmem [#allocation2], %s183
        // Predicated region
        $region29: #{tpu_custom_call.1} parent=27 // pred_check
          %p185 = pneg %p57
        $region30: #{tpu_custom_call.1} parent=27 // pred_check_branch
          %187 = sbr.rel (%p185) target = $region32
        $region31: #{tpu_custom_call.1} parent=27 // pred_region
          %188 = dma.done %s181, 256
        $region32: #{tpu_custom_call.1} parent=27 // pred_fallthru
          _
        %s189 = sand.u32 %s70, 1
        %s190 = scalar_lea.sflag [#allocation6], %s189
        %s191 = sand.u32 %s70, 1
        %s192 = smul.addr %s191, 16
        %s193 = scalar_lea.vmem [#allocation5], %s192
        // Predicated region
        $region33: #{tpu_custom_call.1} parent=27 // pred_check
          %p194 = pneg %p83
        $region34: #{tpu_custom_call.1} parent=27 // pred_check_branch
          %196 = sbr.rel (%p194) target = $region36
        $region35: #{tpu_custom_call.1} parent=27 // pred_region
          %197 = dma.done %s190, 256
        $region36: #{tpu_custom_call.1} parent=27 // pred_fallthru
          _
        %s198 = sand.u32 %s44, 1
        %s199 = scalar_lea.sflag [#allocation3], %s198
        %s200 = sand.u32 %s44, 1
        %s201 = smul.addr %s200, 16
        %s202 = scalar_lea.vmem [#allocation2], %s201
        %p203 = pneg %p57
        %p204 = pneg %p54
        %s205 = sand.u32 %s70, 1
        %s206 = scalar_lea.sflag [#allocation6], %s205
        %s207 = sand.u32 %s70, 1
        %s208 = smul.addr %s207, 16
        %s209 = scalar_lea.vmem [#allocation5], %s208
        %p210 = pneg %p83
        %p211 = pneg %p80
        %p212 = pneg %p111
        %p213 = pneg %p108
        %s214 = sand.u32 %s98, 1
        %s215 = scalar_lea.sflag [#allocation4], %s214
        %s216 = sand.u32 %s98, 1
        %s217 = smul.addr %s216, 8
        %s218 = scalar_lea.vmem [#allocation7], %s217
        %s219 = smul.u32 2, %s26
        %s220 = smul.u32 2, %s26
        %v221 = vld [vmem:[%s184] sm:$0x1]
        %v222 = vld [vmem:[%s184 + $0x8] sm:$0x1]
        %v223 = vld [vmem:[%s184 + $0x1] sm:$0x1]
        %v224 = vld [vmem:[%s184 + $0x9] sm:$0x1]
        %v225 = vld [vmem:[%s184 + $0x2] sm:$0x1]
        %v226 = vld [vmem:[%s184 + $0xa] sm:$0x1]
        %v227 = vld [vmem:[%s184 + $0x3] sm:$0x1]
        %v228 = vld [vmem:[%s184 + $0xb] sm:$0x1]
        %v229 = vld [vmem:[%s184 + $0x4] sm:$0x1]
        %v230 = vld [vmem:[%s184 + $0xc] sm:$0x1]
        %v231 = vld [vmem:[%s184 + $0x5] sm:$0x1]
        %v232 = vld [vmem:[%s184 + $0xd] sm:$0x1]
        %v233 = vld [vmem:[%s184 + $0x6] sm:$0x1]
        %v234 = vld [vmem:[%s184 + $0xe] sm:$0x1]
        %v235 = vld [vmem:[%s193] sm:$0x1]
        %v236 = vld [vmem:[%s193 + $0x8] sm:$0x1]
        %v237 = vld [vmem:[%s193 + $0x1] sm:$0x1]
        %v238 = vld [vmem:[%s193 + $0x9] sm:$0x1]
        %v239 = vld [vmem:[%s193 + $0x2] sm:$0x1]
        %v240 = vld [vmem:[%s193 + $0xa] sm:$0x1]
        %v241 = vld [vmem:[%s193 + $0x3] sm:$0x1]
        %v242 = vld [vmem:[%s193 + $0xb] sm:$0x1]
        %v243 = vld [vmem:[%s193 + $0x4] sm:$0x1]
        %v244 = vld [vmem:[%s193 + $0xc] sm:$0x1]
        %v245 = vld [vmem:[%s193 + $0x5] sm:$0x1]
        %v246 = vld [vmem:[%s193 + $0xd] sm:$0x1]
        %v247 = vlaneseq
        %v248 = vshrl.u32 %v247, 7
        %v249 = vsub.s32 0, %v248
        %v250 = vrot.slane %v235, %v249
        %252 = vbcast.lane.b32.xlu0 %v250, 256
        %v253 = vpop.permute.xlu0 %252
        %v254 = vlaneseq
        %v255 = vshrl.u32 %v254, 7
        %v256 = vsub.s32 0, %v255
        %v257 = vrot.slane %v236, %v256
        %259 = vbcast.lane.b32.xlu0 %v257, 256
        %v260 = vpop.permute.xlu0 %259
        %v261 = vlaneseq
        %v262 = vshrl.u32 %v261, 7
        %v263 = vsub.s32 0, %v262
        %v264 = vrot.slane %v237, %v263
        %266 = vbcast.lane.b32.xlu0 %v264, 256
        %v267 = vpop.permute.xlu0 %266
        %v268 = vlaneseq
        %v269 = vshrl.u32 %v268, 7
        %v270 = vsub.s32 0, %v269
        %v271 = vrot.slane %v238, %v270
        %273 = vbcast.lane.b32.xlu0 %v271, 256
        %v274 = vpop.permute.xlu0 %273
        %v275 = vlaneseq
        %v276 = vshrl.u32 %v275, 7
        %v277 = vsub.s32 0, %v276
        %v278 = vrot.slane %v239, %v277
        %280 = vbcast.lane.b32.xlu0 %v278, 256
        %v281 = vpop.permute.xlu0 %280
        %v282 = vlaneseq
        %v283 = vshrl.u32 %v282, 7
        %v284 = vsub.s32 0, %v283
        %v285 = vrot.slane %v240, %v284
        %287 = vbcast.lane.b32.xlu0 %v285, 256
        %v288 = vpop.permute.xlu0 %287
        %v289 = vlaneseq
        %v290 = vshrl.u32 %v289, 7
        %v291 = vsub.s32 0, %v290
        %v292 = vrot.slane %v241, %v291
        %294 = vbcast.lane.b32.xlu0 %v292, 256
        %v295 = vpop.permute.xlu0 %294
        %v296 = vlaneseq
        %v297 = vshrl.u32 %v296, 7
        %v298 = vsub.s32 0, %v297
        %v299 = vrot.slane %v242, %v298
        %301 = vbcast.lane.b32.xlu0 %v299, 256
        %v302 = vpop.permute.xlu0 %301
        %v303 = vlaneseq
        %v304 = vshrl.u32 %v303, 7
        %v305 = vsub.s32 0, %v304
        %v306 = vrot.slane %v225, %v305
        %v307 = vlaneseq
        %v308 = vshrl.u32 %v307, 7
        %v309 = vsub.s32 0, %v308
        %v310 = vrot.slane %v226, %v309
        %v311 = vmin.f32 %v306, %v281
        %v312 = vmin.f32 %v310, %v288
        %v313 = vlaneseq
        %v314 = vshrl.u32 %v313, 7
        %v315 = vsub.s32 0, %v314
        %v316 = vrot.slane %v221, %v315
        %v317 = vlaneseq
        %v318 = vshrl.u32 %v317, 7
        %v319 = vsub.s32 0, %v318
        %v320 = vrot.slane %v222, %v319
        %v321 = vmax.f32 %v316, %v253
        %v322 = vmax.f32 %v320, %v260
        %v323 = vsub.f32 %v311, %v321
        %v324 = vsub.f32 %v312, %v322
        %v325 = vmax.f32 %v323, 0.0
        %v326 = vmax.f32 %v324, 0.0
        %v327 = vlaneseq
        %v328 = vshrl.u32 %v327, 7
        %v329 = vsub.s32 0, %v328
        %v330 = vrot.slane %v227, %v329
        %v331 = vlaneseq
        %v332 = vshrl.u32 %v331, 7
        %v333 = vsub.s32 0, %v332
        %v334 = vrot.slane %v228, %v333
        %v335 = vmin.f32 %v330, %v295
        %v336 = vmin.f32 %v334, %v302
        %v337 = vlaneseq
        %v338 = vshrl.u32 %v337, 7
        %v339 = vsub.s32 0, %v338
        %v340 = vrot.slane %v223, %v339
        %v341 = vlaneseq
        %v342 = vshrl.u32 %v341, 7
        %v343 = vsub.s32 0, %v342
        %v344 = vrot.slane %v224, %v343
        %v345 = vmax.f32 %v340, %v267
        %v346 = vmax.f32 %v344, %v274
        %v347 = vsub.f32 %v335, %v345
        %v348 = vsub.f32 %v336, %v346
        %v349 = vmax.f32 %v347, 0.0
        %v350 = vmax.f32 %v348, 0.0
        %v351 = vmul.f32 %v325, %v349
        %v352 = vmul.f32 %v326, %v350
        %v353 = vsub.f32 %v225, %v221
        %v354 = vsub.f32 %v226, %v222
        %v355 = vsub.f32 %v227, %v223
        %v356 = vsub.f32 %v228, %v224
        %v357 = vmul.f32 %v353, %v355
        %v358 = vmul.f32 %v354, %v356
        %v359 = vsub.f32 %v239, %v235
        %v360 = vsub.f32 %v240, %v236
        %v361 = vsub.f32 %v241, %v237
        %v362 = vsub.f32 %v242, %v238
        %v363 = vmul.f32 %v359, %v361
        %v364 = vmul.f32 %v360, %v362
        %v365 = vlaneseq
        %v366 = vshrl.u32 %v365, 7
        %v367 = vsub.s32 0, %v366
        %v368 = vrot.slane %v363, %v367
        %370 = vbcast.lane.b32.xlu0 %v368, 256
        %v371 = vpop.permute.xlu0 %370
        %v372 = vlaneseq
        %v373 = vshrl.u32 %v372, 7
        %v374 = vsub.s32 0, %v373
        %v375 = vrot.slane %v364, %v374
        %377 = vbcast.lane.b32.xlu0 %v375, 256
        %v378 = vpop.permute.xlu0 %377
        %v379 = vlaneseq
        %v380 = vshrl.u32 %v379, 7
        %v381 = vsub.s32 0, %v380
        %v382 = vrot.slane %v357, %v381
        %v383 = vlaneseq
        %v384 = vshrl.u32 %v383, 7
        %v385 = vsub.s32 0, %v384
        %v386 = vrot.slane %v358, %v385
        %v387 = vadd.f32 %v382, %v371
        %v388 = vadd.f32 %v386, %v378
        %v389 = vsub.f32 %v387, %v351
        %v390 = vsub.f32 %v388, %v352
        %v391 = vmax.f32 %v389, 1e-12
        %v392 = vmax.f32 %v390, 1e-12
        %v393 = vrcp.pop %v391
        %v394 = vmul.f32 %v351, %v393
        %v395 = vrcp.pop %v392
        %v396 = vmul.f32 %v352, %v395
        %v397 = vlaneseq
        %v398 = vshrl.u32 %v397, 7
        %v399 = vsub.s32 0, %v398
        %v400 = vrot.slane %v245, %v399
        %402 = vbcast.lane.b32.xlu0 %v400, 256
        %v403 = vpop.permute.xlu0 %402
        %v404 = vlaneseq
        %v405 = vshrl.u32 %v404, 7
        %v406 = vsub.s32 0, %v405
        %v407 = vrot.slane %v246, %v406
        %409 = vbcast.lane.b32.xlu0 %v407, 256
        %v410 = vpop.permute.xlu0 %409
        %vm411 = vcmp.gt.f32.partialorder %v403, 0.5
        %vm412 = vcmp.gt.f32.partialorder %v410, 0.5
        %v413 = vsel %vm411, 1, 0
        %v414 = vsel %vm412, 1, 0
        %vm415 = vcmp.eq.s32.totalorder %v413, 1
        %vm416 = vcmp.eq.s32.totalorder %v414, 1
        %v417 = vsel %vm415, %v394, -1.0
        %v418 = vsel %vm416, %v396, -1.0
        %v419 = vrot.slane %v417, 4
        %v420 = vmax.f32 %v417, %v419
        %v421 = vrot.slane %v420, 2
        %v422 = vmax.f32 %v420, %v421
        %v423 = vrot.slane %v422, 1
        %v424 = vmax.f32 %v422, %v423
        %v425 = vrot.slane %v418, 4
        %v426 = vmax.f32 %v418, %v425
        %v427 = vrot.slane %v426, 2
        %v428 = vmax.f32 %v426, %v427
        %v429 = vrot.slane %v428, 1
        %v430 = vmax.f32 %v428, %v429
        %v431 = vlaneseq
        %v432 = vshrl.u32 %v431, 7
        %v433 = vcvt.s32.f32 %v432
        %vm434 = vcmp.ge.f32.partialorder %v417, %v424
        %vm435 = vcmp.ge.f32.partialorder %v418, %v430
        %v436 = vsel %vm434, %v433, 8.0
        %v437 = vsel %vm435, %v433, 8.0
        %v438 = vrot.slane %v436, 4
        %v439 = vmin.f32 %v436, %v438
        %v440 = vrot.slane %v439, 2
        %v441 = vmin.f32 %v439, %v440
        %v442 = vrot.slane %v441, 1
        %v443 = vmin.f32 %v441, %v442
        %v444 = vrot.slane %v437, 4
        %v445 = vmin.f32 %v437, %v444
        %v446 = vrot.slane %v445, 2
        %v447 = vmin.f32 %v445, %v446
        %v448 = vrot.slane %v447, 1
        %v449 = vmin.f32 %v447, %v448
        %vm450 = vcmp.eq.f32.partialorder %v433, %v443
        %vm451 = vcmp.eq.f32.partialorder %v433, %v449
        %v452 = vsel %vm450, 1, 0
        %v453 = vsel %vm451, 1, 0
        %v454 = vcvt.s32.f32 %v452
        %v455 = vcvt.s32.f32 %v453
        %v456 = vmul.f32 %v454, %v253
        %v457 = vmul.f32 %v455, %v260
        %v458 = vrot.slane %v456, 4
        %v459 = vadd.f32 %v456, %v458
        %v460 = vrot.slane %v459, 2
        %v461 = vadd.f32 %v459, %v460
        %v462 = vrot.slane %v461, 1
        %v463 = vadd.f32 %v461, %v462
        %v464 = vrot.slane %v457, 4
        %v465 = vadd.f32 %v457, %v464
        %v466 = vrot.slane %v465, 2
        %v467 = vadd.f32 %v465, %v466
        %v468 = vrot.slane %v467, 1
        %v469 = vadd.f32 %v467, %v468
        %v470 = vmul.f32 %v454, %v267
        %v471 = vmul.f32 %v455, %v274
        %v472 = vrot.slane %v470, 4
        %v473 = vadd.f32 %v470, %v472
        %v474 = vrot.slane %v473, 2
        %v475 = vadd.f32 %v473, %v474
        %v476 = vrot.slane %v475, 1
        %v477 = vadd.f32 %v475, %v476
        %v478 = vrot.slane %v471, 4
        %v479 = vadd.f32 %v471, %v478
        %v480 = vrot.slane %v479, 2
        %v481 = vadd.f32 %v479, %v480
        %v482 = vrot.slane %v481, 1
        %v483 = vadd.f32 %v481, %v482
        %v484 = vmul.f32 %v454, %v281
        %v485 = vmul.f32 %v455, %v288
        %v486 = vrot.slane %v484, 4
        %v487 = vadd.f32 %v484, %v486
        %v488 = vrot.slane %v487, 2
        %v489 = vadd.f32 %v487, %v488
        %v490 = vrot.slane %v489, 1
        %v491 = vadd.f32 %v489, %v490
        %v492 = vrot.slane %v485, 4
        %v493 = vadd.f32 %v485, %v492
        %v494 = vrot.slane %v493, 2
        %v495 = vadd.f32 %v493, %v494
        %v496 = vrot.slane %v495, 1
        %v497 = vadd.f32 %v495, %v496
        %v498 = vmul.f32 %v454, %v295
        %v499 = vmul.f32 %v455, %v302
        %v500 = vrot.slane %v498, 4
        %v501 = vadd.f32 %v498, %v500
        %v502 = vrot.slane %v501, 2
        %v503 = vadd.f32 %v501, %v502
        %v504 = vrot.slane %v503, 1
        %v505 = vadd.f32 %v503, %v504
        %v506 = vrot.slane %v499, 4
        %v507 = vadd.f32 %v499, %v506
        %v508 = vrot.slane %v507, 2
        %v509 = vadd.f32 %v507, %v508
        %v510 = vrot.slane %v509, 1
        %v511 = vadd.f32 %v509, %v510
        %v512 = vlaneseq
        %v513 = vshrl.u32 %v512, 7
        %v514 = vsub.s32 0, %v513
        %v515 = vrot.slane %v243, %v514
        %517 = vbcast.lane.b32.xlu0 %v515, 256
        %v518 = vpop.permute.xlu0 %517
        %v519 = vlaneseq
        %v520 = vshrl.u32 %v519, 7
        %v521 = vsub.s32 0, %v520
        %v522 = vrot.slane %v244, %v521
        %524 = vbcast.lane.b32.xlu0 %v522, 256
        %v525 = vpop.permute.xlu0 %524
        %v526 = vmul.f32 %v454, %v518
        %v527 = vmul.f32 %v455, %v525
        %v528 = vrot.slane %v526, 4
        %v529 = vadd.f32 %v526, %v528
        %v530 = vrot.slane %v529, 2
        %v531 = vadd.f32 %v529, %v530
        %v532 = vrot.slane %v531, 1
        %v533 = vadd.f32 %v531, %v532
        %v534 = vrot.slane %v527, 4
        %v535 = vadd.f32 %v527, %v534
        %v536 = vrot.slane %v535, 2
        %v537 = vadd.f32 %v535, %v536
        %v538 = vrot.slane %v537, 1
        %v539 = vadd.f32 %v537, %v538
        %vm540 = vcmp.eq.f32.partialorder %v231, %v533
        %vm541 = vcmp.eq.f32.partialorder %v232, %v539
        %v542 = vsel %vm540, 0.6883986, 0.7008986
        %v543 = vsel %vm541, 0.6883986, 0.7008986
        %v544 = vmax.f32 %v221, %v463
        %v545 = vmax.f32 %v222, %v469
        %v546 = vmax.f32 %v223, %v477
        %v547 = vmax.f32 %v224, %v483
        %v548 = vmin.f32 %v225, %v491
        %v549 = vmin.f32 %v226, %v497
        %v550 = vmin.f32 %v227, %v505
        %v551 = vmin.f32 %v228, %v511
        %v552 = vsub.f32 %v548, %v544
        %v553 = vsub.f32 %v549, %v545
        %v554 = vmax.f32 %v552, 0.0
        %v555 = vmax.f32 %v553, 0.0
        %v556 = vsub.f32 %v550, %v546
        %v557 = vsub.f32 %v551, %v547
        %v558 = vmax.f32 %v556, 0.0
        %v559 = vmax.f32 %v557, 0.0
        %v560 = vmul.f32 %v554, %v558
        %v561 = vmul.f32 %v555, %v559
        %v562 = vsub.f32 %v491, %v463
        %v563 = vsub.f32 %v497, %v469
        %v564 = vsub.f32 %v505, %v477
        %v565 = vsub.f32 %v511, %v483
        %v566 = vmul.f32 %v562, %v564
        %v567 = vmul.f32 %v563, %v565
        %v568 = vadd.f32 %v357, %v566
        %v569 = vadd.f32 %v358, %v567
        %v570 = vsub.f32 %v568, %v560
        %v571 = vsub.f32 %v569, %v561
        %v572 = vmax.f32 %v570, 1e-12
        %v573 = vmax.f32 %v571, 1e-12
        %v574 = vrcp.pop %v572
        %v575 = vmul.f32 %v560, %v574
        %v576 = vrcp.pop %v573
        %v577 = vmul.f32 %v561, %v576
        %v578 = vmin.f32 %v221, %v463
        %v579 = vmin.f32 %v222, %v469
        %v580 = vmin.f32 %v223, %v477
        %v581 = vmin.f32 %v224, %v483
        %v582 = vmax.f32 %v225, %v491
        %v583 = vmax.f32 %v226, %v497
        %v584 = vmax.f32 %v227, %v505
        %v585 = vmax.f32 %v228, %v511
        %v586 = vsub.f32 %v582, %v578
        %v587 = vsub.f32 %v583, %v579
        %v588 = vsub.f32 %v584, %v580
        %v589 = vsub.f32 %v585, %v581
        %v590 = vmul.f32 %v586, %v588
        %v591 = vmul.f32 %v587, %v589
        %v592 = vsub.f32 %v590, %v570
        %v593 = vsub.f32 %v591, %v571
        %v594 = vmax.f32 %v590, 1e-12
        %v595 = vmax.f32 %v591, 1e-12
        %v596 = vrcp.pop %v594
        %v597 = vmul.f32 %v592, %v596
        %v598 = vrcp.pop %v595
        %v599 = vmul.f32 %v593, %v598
        %v600 = vsub.f32 %v575, %v597
        %v601 = vsub.f32 %v577, %v599
        %v602 = vsub.f32 1.0, %v600
        %v603 = vsub.f32 1.0, %v601
        %v604 = vmax.f32 %v229, 0.0
        %v605 = vmax.f32 %v230, 0.0
        %v606 = vsub.f32 %v604, %v229
        %v607 = vsub.f32 %v605, %v230
        %v608 = vand.u32 2147483647, %v229
        %v609 = vand.u32 2147483647, %v230
        %v610 = vsub.f32 0.0, %v608
        %v611 = vsub.f32 0.0, %v609
        %v612 = vmul.f32 %v610, 1.442695
        %v613 = vpow.pop %v612
        %v614 = vmul.f32 %v611, 1.442695
        %v615 = vpow.pop %v614
        %v616 = vadd.f32 %v613, 1.0
        %v617 = vlog2.pop %v616
        %v618 = vmul.f32 %v617, 0.6931472
        %v619 = vmul.f32 -0.5, %v613
        %v620 = vadd.f32 %v619, 1.0
        %v621 = vmul.f32 %v620, %v613
        %v622 = vand.u32 2147483647, %v613
        %vm623 = vcmp.lt.f32.partialorder %v622, 0.0004427343
        %v624 = vsel %vm623, %v621, %v618
        %v625 = vadd.f32 %v615, 1.0
        %v626 = vlog2.pop %v625
        %v627 = vmul.f32 %v626, 0.6931472
        %v628 = vmul.f32 -0.5, %v615
        %v629 = vadd.f32 %v628, 1.0
        %v630 = vmul.f32 %v629, %v615
        %v631 = vand.u32 2147483647, %v615
        %vm632 = vcmp.lt.f32.partialorder %v631, 0.0004427343
        %v633 = vsel %vm632, %v630, %v627
        %v634 = vadd.f32 %v606, %v624
        %v635 = vadd.f32 %v607, %v633
        %vm636 = vcmp.gt.f32.partialorder %v424, 0.5
        %vm637 = vcmp.gt.f32.partialorder %v430, 0.5
        %vm638 = vcmp.gt.f32.partialorder %v233, 0.5
        %vm639 = vcmp.gt.f32.partialorder %v234, 0.5
        %vm640 = vmand %vm636, %vm638
        %vm641 = vmand %vm637, %vm639
        %v642 = vsel %vm640, 1, 0
        %v643 = vsel %vm641, 1, 0
        %v644 = vcvt.s32.f32 %v642
        %v645 = vcvt.s32.f32 %v643
        %v646 = vmul.f32 %v644, %v542
        %v647 = vmul.f32 %v645, %v543
        %v650 = vrot.slane %v647, 7
        %vm651 = vcmask 1041409
        %v652 = vsel %vm651, %v650, %v646
        %vm654 = vcmask 1041408
        %v655 = vsel %vm654, %v652, 0.0
        %v656 = vrot.slane %v655, 4
        %v657 = vadd.f32 %v655, %v656
        %v658 = vrot.slane %v657, 2
        %v659 = vadd.f32 %v657, %v658
        %v660 = vrot.slane %v659, 1
        %v661 = vadd.f32 %v659, %v660
        %v662 = vmul.f32 %v644, %v602
        %v663 = vmul.f32 %v645, %v603
        %v666 = vrot.slane %v663, 7
        %v667 = vsel %vm651, %v666, %v662
        %v669 = vsel %vm654, %v667, 0.0
        %v670 = vrot.slane %v669, 4
        %v671 = vadd.f32 %v669, %v670
        %v672 = vrot.slane %v671, 2
        %v673 = vadd.f32 %v671, %v672
        %v674 = vrot.slane %v673, 1
        %v675 = vadd.f32 %v673, %v674
        %v676 = vmul.f32 %v644, %v634
        %v677 = vmul.f32 %v645, %v635
        %v680 = vrot.slane %v677, 7
        %v681 = vsel %vm651, %v680, %v676
        %v683 = vsel %vm654, %v681, 0.0
        %v684 = vrot.slane %v683, 4
        %v685 = vadd.f32 %v683, %v684
        %v686 = vrot.slane %v685, 2
        %v687 = vadd.f32 %v685, %v686
        %v688 = vrot.slane %v687, 1
        %v689 = vadd.f32 %v687, %v688
        %v692 = vrot.slane %v645, 7
        %v693 = vsel %vm651, %v692, %v644
        %v695 = vsel %vm654, %v693, 0.0
        %v696 = vrot.slane %v695, 4
        %v697 = vadd.f32 %v695, %v696
        %v698 = vrot.slane %v697, 2
        %v699 = vadd.f32 %v697, %v698
        %v700 = vrot.slane %v699, 1
        %v701 = vadd.f32 %v699, %v700
        %v703 = vrot.slane %v675, 7
        %v706 = vrot.slane %v689, 6
        %v709 = vrot.slane %v701, 5
        %vm711 = vcmask 1040384
        %v712 = vsel %vm711, %v661, %v703
        %v713 = vsel %vm654, %v712, %v706
        %vm714 = vcmask 1042432
        %v715 = vsel %vm714, %v713, %v709
        %vm716 = vcmask 1043456
        %v717 = vsel %vm716, %v715, 0.0
        %718 = vst [vmem:[%s218] sm:$0xff] %v717
        %s719 = sand.u32 %s98, 1
        %s720 = scalar_lea.sflag [#allocation4], %s719
        %s721 = sand.u32 %s98, 1
        %s722 = smul.addr %s721, 8
        %s723 = scalar_lea.vmem [#allocation7], %s722
        // Predicated region
        $region37: #{tpu_custom_call.1} parent=27 // pred_check
          %p724 = pneg %p108
        $region38: #{tpu_custom_call.1} parent=27 // pred_check_branch
          %726 = sbr.rel (%p724) target = $region40
        $region39: #{tpu_custom_call.1} parent=27 // pred_region
          %s728 = ssub.s32 128, 128
          %729 = vsyncadd %s720, %s728
          %s730 = sadd.s32 %s27, %s26
          %s731 = smul.addr %s730, 128
          %s732 = scalar_lea.hbm %s2, %s731
          %s734 = sshll.u32 %s723, 4
          %s735 = int_to_ptr.vmem [resolvable:$true] %s734
          %737 = dma.vmem_to_hbm [thread:$0]  %s735, 128, %s732, %s720
        $region40: #{tpu_custom_call.1} parent=27 // pred_fallthru
          _
      $region28: #{tpu_custom_call.1} parent=5 // pred_fallthru
        _
      %p738 = scmp.le.s32.totalorder 2, %s17
      // Predicated region
      $region41: #{tpu_custom_call.1} parent=5 // pred_check
        %p739 = pneg %p738
      $region42: #{tpu_custom_call.1} parent=5 // pred_check_branch
        %741 = sbr.rel (%p739) target = $region44
      $region43: #{tpu_custom_call.1} parent=5 // pred_region
        %s742 = ssub.s32 %s17, 2
        // Predicated region
        $region45: #{tpu_custom_call.1} parent=43 // pred_check
          %p743 = pneg %p114
        $region46: #{tpu_custom_call.1} parent=43 // pred_check_branch
          %745 = sbr.rel (%p743) target = $region48
        $region47: #{tpu_custom_call.1} parent=43 // pred_region
          %s746 = sand.u32 %s99, 1
          %s747 = scalar_lea.sflag [#allocation4], %s746
          %s748 = sand.u32 %s99, 1
          %s749 = smul.addr %s748, 8
          %s750 = scalar_lea.vmem [#allocation7], %s749
          %751 = dma.done %s747, 128
        $region48: #{tpu_custom_call.1} parent=43 // pred_fallthru
          _
      $region44: #{tpu_custom_call.1} parent=5 // pred_fallthru
        _
    $region6: #{tpu_custom_call.1} parent=1 // loop_footer
      %s21 = sadd.s32 1, %s17
    $region7: #{tpu_custom_call.1} parent=1 // loop_footer_branch
      %16 = sbr.rel target = $region3
    $region8: #{tpu_custom_call.1} parent=1 // loop_exit
      _
    %752 = vsyncpa [#allocation3], 1
    %s753 = scalar_lea.sflag [#allocation3], 1
    %754 = vsyncpa %s753, 1
    %755 = vsyncpa [#allocation6], 1
    %s756 = scalar_lea.sflag [#allocation6], 1
    %757 = vsyncpa %s756, 1
    %758 = vsyncpa [#allocation4], 1
    %s759 = scalar_lea.sflag [#allocation4], 1
    %760 = vsyncpa %s759, 1

</llo_original>
